<compile_context>
chip_gen: v6e
topology: v6e:2x2x1
jax: 0.10.0
libtpu: 0.0.40
codegen_flags: <defaults>
</compile_context>

<pallas_src>
import functools

import numpy as np

import jax
import jax.numpy as jnp
from jax import lax
from jax.experimental import pallas as pl
from jax.experimental.pallas import tpu as pltpu


_TARGET_GRID_STEPS = 8   # aim for >= 8 steps so v7x megacore can split the grid


def _round_up(v, m):
    return ((v + m - 1) // m) * m


def _pick_tile(n, granule, min_tile, max_tile):
    """Tile size along the streamed axis.

    Multiple of `granule`, clamped to [min_tile, max_tile], aiming for
    >= _TARGET_GRID_STEPS grid steps on large inputs.  If the result would
    cover the whole array we return exactly `n` (a block equal to the full dim
    is always legal), so small/ragged inputs collapse to one step with no
    padding and no post-kernel slice.
    """
    min_tile = _round_up(min_tile, granule)
    max_tile = max(min_tile, _round_up(max_tile, granule))
    t = _round_up(max(1, pl.cdiv(n, _TARGET_GRID_STEPS)), granule)
    t = max(min_tile, min(max_tile, t))
    if t >= n:
        return n
    return t


# --------------------------------------------------------------------------
# Kernel 1: PyTorch-compatible row layout  (N, c_out)
# --------------------------------------------------------------------------
def _ffenc_rows_kernel(x_ref, src_ref, scale_ref, o_ref, *, dk, include_input):
    """out[r, :] = [cos(x[r]*f), sin(x[r]*f), x[r]] assembled in one lane row."""
    x = x_ref[...].astype(jnp.float32)            # (T, D); cast inside kernel
    d_in = x.shape[1]
    c_out = o_ref.shape[1]

    src = src_ref[...]                            # (1, C) i32: source coord per lane
    scale = scale_ref[...]                        # (1, C) f32: freq (or 1.0) per lane

    # Lane-gather x into output lane positions with D-1 selects.  Unlike the
    # old "sum of x[:,d]*W[d,:]" construction this never forms 0*x, so
    # inf/NaN coordinates cannot leak into other lanes.
    xg = x[:, 0:1]                                # (T, 1) -> broadcast to (T, C)
    for d in range(1, d_in):                      # D is tiny & static
        xg = jnp.where(src == d, x[:, d:d + 1], xg)
    e = xg * scale                                # (T, C): embed | embed | x

    col = lax.broadcasted_iota(jnp.int32, (1, c_out), 1)
    cos_e = jnp.cos(e)                            # 1 EUP push per (8, C) vreg row
    sin_e = jnp.sin(e)
    if include_input:
        out = jnp.where(col < dk, cos_e, jnp.where(col < 2 * dk, sin_e, e))
    else:
        out = jnp.where(col < dk, cos_e, sin_e)
    o_ref[...] = out.astype(o_ref.dtype)          # single store per vreg row


def fourier_feat_enc(x, freq_bands, include_input=True, *, block_rows=4096):
    """Pallas TPU FourierFeatEnc.forward, PyTorch output layout (..., c_out)."""
    orig_shape = x.shape
    d_in = int(orig_shape[-1])
    k = int(freq_bands.shape[0])
    dk = d_in * k
    c_out = 2 * dk + (d_in if include_input else 0)

    n = 1
    for s in orig_shape[:-1]:
        n *= int(s)

    x2 = x.reshape(n, d_in)                       # row-major reshape: free

    # Per-lane (source coordinate, scale) maps; column order matches PyTorch's
    # (x[..., None] * freq_bands).view(..., -1) flattening (d-major, j-minor).
    fb = jnp.asarray(freq_bands, jnp.float32)
    scale_core = jnp.tile(fb, d_in)               # scale[d*k + j] = f_j
    src_core = np.repeat(np.arange(d_in, dtype=np.int32), k)
    if include_input:
        scale = jnp.concatenate([scale_core, scale_core,
                                 jnp.ones((d_in,), jnp.float32)])
        src = np.concatenate([src_core, src_core,
                              np.arange(d_in, dtype=np.int32)])
    else:
        scale = jnp.concatenate([scale_core, scale_core])
        src = np.concatenate([src_core, src_core])
    scale = scale.reshape(1, c_out)
    src = jnp.asarray(src.reshape(1, c_out))

    tile_n = _pick_tile(n, granule=8, min_tile=512, max_tile=block_rows)
    grid = (pl.cdiv(n, tile_n),)

    kernel = functools.partial(_ffenc_rows_kernel, dk=dk,
                               include_input=include_input)

    out = pl.pallas_call(
        kernel,
        out_shape=jax.ShapeDtypeStruct((n, c_out), x.dtype),
        grid=grid,
        in_specs=[
            pl.BlockSpec((tile_n, d_in), lambda i: (i, 0)),   # streamed rows
            pl.BlockSpec((1, c_out), lambda i: (0, 0)),       # resident lane->coord
            pl.BlockSpec((1, c_out), lambda i: (0, 0)),       # resident lane->freq
        ],
        out_specs=pl.BlockSpec((tile_n, c_out), lambda i: (i, 0)),
        compiler_params=pltpu.CompilerParams(
            dimension_semantics=("parallel",),
        ),
        cost_estimate=pl.CostEstimate(
            flops=4 * n * c_out,
            transcendentals=2 * n * c_out,
            bytes_accessed=(n * d_in + n * c_out) * x.dtype.itemsize + 8 * c_out,
        ),
    )(x2, src, scale)

    return out.reshape(*orig_shape[:-1], c_out)


# --------------------------------------------------------------------------
# Kernel 2: lane-dense transposed layout  (c_out, N)   -- review item 1
# --------------------------------------------------------------------------
def _ffenc_cols_kernel(x_ref, f_ref, o_ref, *, k, dk, include_input):
    """x (D, L) -> out (c_out, L) = [cos(f*x); sin(f*x); x], all lane-dense."""
    f = f_ref[...]                                        # (k, 1) f32 freq column
    d_in = x_ref.shape[0]
    for d in range(d_in):                                 # D is tiny & static
        xd = x_ref[d:d + 1, :].astype(jnp.float32)        # (1, L) sublane row
        e = xd * f                                        # (k, L) lane-dense embed
        o_ref[d * k:(d + 1) * k, :] = jnp.cos(e).astype(o_ref.dtype)
        o_ref[dk + d * k:dk + (d + 1) * k, :] = jnp.sin(e).astype(o_ref.dtype)
    if include_input:
        o_ref[2 * dk:, :] = x_ref[...].astype(o_ref.dtype)


def fourier_feat_enc_transposed(x, freq_bands, include_input=True, *,
                                block_cols=16384):
    """Lane-dense variant: returns the encoding feature-major as (c_out, N)."""
    orig_shape = x.shape
    d_in = int(orig_shape[-1])
    k = int(freq_bands.shape[0])
    dk = d_in * k
    c_out = 2 * dk + (d_in if include_input else 0)

    n = 1
    for s in orig_shape[:-1]:
        n *= int(s)

    # Only the (small) input is transposed outside the kernel; the (large)
    # output is produced directly in the lane-dense layout.
    xT = x.reshape(n, d_in).T                             # (D, N)
    f_col = jnp.asarray(freq_bands, jnp.float32).reshape(k, 1)

    tile_l = _pick_tile(n, granule=128, min_tile=512, max_tile=block_cols)
    grid = (pl.cdiv(n, tile_l),)

    kernel = functools.partial(_ffenc_cols_kernel, k=k, dk=dk,
                               include_input=include_input)

    out = pl.pallas_call(
        kernel,
        out_shape=jax.ShapeDtypeStruct((c_out, n), x.dtype),
        grid=grid,
        in_specs=[
            pl.BlockSpec((d_in, tile_l), lambda i: (0, i)),   # streamed columns
            pl.BlockSpec((k, 1), lambda i: (0, 0)),           # resident freq column
        ],
        out_specs=pl.BlockSpec((c_out, tile_l), lambda i: (0, i)),
        compiler_params=pltpu.CompilerParams(
            dimension_semantics=("parallel",),
        ),
        cost_estimate=pl.CostEstimate(
            flops=2 * n * c_out,
            transcendentals=2 * n * dk,
            bytes_accessed=(n * d_in + n * c_out) * x.dtype.itemsize + 4 * k,
        ),
    )(xT, f_col)
    return out


# --------------------------------------------------------------------------
# Module wrapper
# --------------------------------------------------------------------------
class FourierFeatEncPallas:
    """JAX/Pallas re-implementation of the PyTorch FourierFeatEnc module."""

    def __init__(self, k, include_input=True, use_logspace=False, max_freq=None,
                 *, block_rows=4096, block_cols=16384):
        if use_logspace:
            freq_bands = (2.0 ** np.arange(0, k, dtype=np.float32)) * np.pi
        else:
            assert max_freq is not None
            freq_bands = (2.0 ** np.linspace(0.0, float(max_freq), k + 1,
                                             dtype=np.float32)[:-1]) * np.pi
        self.freq_bands = jnp.asarray(freq_bands, jnp.float32)  # buffer analogue
        self.include_input = include_input
        self.block_rows = block_rows
        self.block_cols = block_cols

    def __call__(self, x):
        # PyTorch-compatible (..., 2*D*k [+ D]) output layout.
        return fourier_feat_enc(x, self.freq_bands, self.include_input,
                                block_rows=self.block_rows)

    def encode_transposed(self, x):
        # Lane-dense (c_out, N) output layout (review item 1) for consumers
        # that can fuse / accept feature-major data without a re-transpose.
        return fourier_feat_enc_transposed(x, self.freq_bands,
                                           self.include_input,
                                           block_cols=self.block_cols)


def _reference_forward(freq_bands, include_input, x):
    """Pure-JAX mirror of FourierFeatEnc.forward, for correctness checking."""
    embed = (x[..., None] * freq_bands).reshape(*x.shape[:-1], -1)
    parts = [jnp.cos(embed), jnp.sin(embed)]
    if include_input:
        parts.append(x)
    return jnp.concatenate(parts, axis=-1)


if __name__ == "__main__":
    key = jax.random.PRNGKey(0)

    batch, seq, coord_dim, k = 2, 16, 3, 6
    x = jax.random.uniform(key, (batch, seq, coord_dim), jnp.float32, -1.0, 1.0)
    n_rows = batch * seq

    # 1) log-spaced bands, raw-input passthrough, PyTorch output layout.
    enc = FourierFeatEncPallas(k, include_input=True, use_logspace=True)
    out = jax.block_until_ready(enc(x))
    ref = _reference_forward(enc.freq_bands, True, x)
    c_out = 2 * coord_dim * k + coord_dim
    assert out.shape == (batch, seq, c_out), out.shape
    assert jnp.allclose(out, ref, atol=1e-4, rtol=1e-4), \
        float(jnp.max(jnp.abs(out - ref)))

    # 2) lane-dense transposed fast path of the same encoder.
    out_t = jax.block_until_ready(enc.encode_transposed(x))
    ref_t = ref.reshape(n_rows, c_out).T
    assert out_t.shape == (c_out, n_rows), out_t.shape
    assert jnp.allclose(out_t, ref_t, atol=1e-4, rtol=1e-4), \
        float(jnp.max(jnp.abs(out_t - ref_t)))

    # 3) linspace bands, no input passthrough.
    enc2 = FourierFeatEncPallas(k=4, include_input=False, use_logspace=False,
                                max_freq=3.0)
    out2 = jax.block_until_ready(enc2(x))
    ref2 = _reference_forward(enc2.freq_bands, False, x)
    assert out2.shape == (batch, seq, 2 * coord_dim * 4), out2.shape
    assert jnp.allclose(out2, ref2, atol=1e-4, rtol=1e-4), \
        float(jnp.max(jnp.abs(out2 - ref2)))

    out2_t = jax.block_until_ready(enc2.encode_transposed(x))
    ref2_t = ref2.reshape(n_rows, -1).T
    assert out2_t.shape == ref2_t.shape, out2_t.shape
    assert jnp.allclose(out2_t, ref2_t, atol=1e-4, rtol=1e-4), \
        float(jnp.max(jnp.abs(out2_t - ref2_t)))

    print("KERNEL_OK")
</pallas_src>

<mosaic_0001>
module attributes {stable_mosaic.version = 11 : i64} {
  func.func @_ffenc_rows_kernel(%arg0: i32, %arg1: memref<32x3xf32, #tpu.memory_space<vmem>>, %arg2: memref<1x39xi32, #tpu.memory_space<vmem>>, %arg3: memref<1x39xf32, #tpu.memory_space<vmem>>, %arg4: memref<32x39xf32, #tpu.memory_space<vmem>>) attributes {dimension_semantics = [#tpu.dimension_semantics<parallel>], iteration_bounds = array<i64: 1>, scalar_prefetch = 0 : i64, scratch_operands = 0 : i64, tpu.core_type = #tpu.core_type<tc>, window_params = [{transform_indices = @transform_0, window_bounds = array<i64: 32, 3>}, {pipeline_mode = #tpu.pipeline_mode<synchronous>, transform_indices = @transform_1, window_bounds = array<i64: 1, 39>}, {pipeline_mode = #tpu.pipeline_mode<synchronous>, transform_indices = @transform_2, window_bounds = array<i64: 1, 39>}, {transform_indices = @transform_3, window_bounds = array<i64: 32, 39>}]} {
    %c0 = arith.constant 0 : index
    %c0_0 = arith.constant 0 : index
    %0 = vector.load %arg1[%c0, %c0_0] : memref<32x3xf32, #tpu.memory_space<vmem>>, vector<32x3xf32>
    %c0_1 = arith.constant 0 : index
    %c0_2 = arith.constant 0 : index
    %1 = vector.load %arg2[%c0_1, %c0_2] : memref<1x39xi32, #tpu.memory_space<vmem>>, vector<1x39xi32>
    %c0_3 = arith.constant 0 : index
    %c0_4 = arith.constant 0 : index
    %2 = vector.load %arg3[%c0_3, %c0_4] : memref<1x39xf32, #tpu.memory_space<vmem>>, vector<1x39xf32>
    %3 = vector.extract_strided_slice %0 {offsets = [0, 0], sizes = [32, 1], strides = [1, 1]} : vector<32x3xf32> to vector<32x1xf32>
    %c1_i32 = arith.constant 1 : i32
    %4 = vector.broadcast %c1_i32 : i32 to vector<1x39xi32>
    %5 = arith.cmpi eq, %1, %4 : vector<1x39xi32>
    %6 = vector.extract_strided_slice %0 {offsets = [0, 1], sizes = [32, 1], strides = [1, 1]} : vector<32x3xf32> to vector<32x1xf32>
    %7 = vector.shape_cast %5 : vector<1x39xi1> to vector<1x39xi1>
    %8 = vector.broadcast %7 : vector<1x39xi1> to vector<32x39xi1>
    %9 = vector.shape_cast %6 : vector<32x1xf32> to vector<32x1xf32>
    %10 = vector.broadcast %9 : vector<32x1xf32> to vector<32x39xf32>
    %11 = vector.shape_cast %3 : vector<32x1xf32> to vector<32x1xf32>
    %12 = vector.broadcast %11 : vector<32x1xf32> to vector<32x39xf32>
    %13 = arith.select %8, %10, %12 : vector<32x39xi1>, vector<32x39xf32>
    %c2_i32 = arith.constant 2 : i32
    %14 = vector.broadcast %c2_i32 : i32 to vector<1x39xi32>
    %15 = arith.cmpi eq, %1, %14 : vector<1x39xi32>
    %16 = vector.extract_strided_slice %0 {offsets = [0, 2], sizes = [32, 1], strides = [1, 1]} : vector<32x3xf32> to vector<32x1xf32>
    %17 = vector.shape_cast %15 : vector<1x39xi1> to vector<1x39xi1>
    %18 = vector.broadcast %17 : vector<1x39xi1> to vector<32x39xi1>
    %19 = vector.shape_cast %16 : vector<32x1xf32> to vector<32x1xf32>
    %20 = vector.broadcast %19 : vector<32x1xf32> to vector<32x39xf32>
    %21 = arith.select %18, %20, %13 : vector<32x39xi1>, vector<32x39xf32>
    %22 = vector.broadcast %2 : vector<1x39xf32> to vector<32x39xf32>
    %23 = arith.mulf %21, %22 : vector<32x39xf32>
    %24 = tpu.iota {dimensions = array<i32: 1>} : vector<1x39xi32>
    %25 = math.cos %23 : vector<32x39xf32>
    %26 = math.sin %23 : vector<32x39xf32>
    %c18_i32 = arith.constant 18 : i32
    %27 = vector.broadcast %c18_i32 : i32 to vector<1x39xi32>
    %28 = arith.cmpi slt, %24, %27 : vector<1x39xi32>
    %c36_i32 = arith.constant 36 : i32
    %29 = vector.broadcast %c36_i32 : i32 to vector<1x39xi32>
    %30 = arith.cmpi slt, %24, %29 : vector<1x39xi32>
    %31 = vector.shape_cast %30 : vector<1x39xi1> to vector<1x39xi1>
    %32 = vector.broadcast %31 : vector<1x39xi1> to vector<32x39xi1>
    %33 = arith.select %32, %26, %23 : vector<32x39xi1>, vector<32x39xf32>
    %34 = vector.shape_cast %28 : vector<1x39xi1> to vector<1x39xi1>
    %35 = vector.broadcast %34 : vector<1x39xi1> to vector<32x39xi1>
    %36 = arith.select %35, %25, %33 : vector<32x39xi1>, vector<32x39xf32>
    %c0_5 = arith.constant 0 : index
    %c0_6 = arith.constant 0 : index
    %37 = vector.load %arg4[%c0_5, %c0_6] : memref<32x39xf32, #tpu.memory_space<vmem>>, vector<32x39xf32>
    tpu.vector_store %arg4[%c0_5, %c0_6], %36 {strides = array<i32>} : memref<32x39xf32, #tpu.memory_space<vmem>>, vector<32x39xf32>,
    return
  }
  func.func @transform_0(%arg0: i32) -> (i32, i32) {
    %c0_i32 = arith.constant 0 : i32
    %c0_i32_0 = arith.constant 0 : i32
    return %arg0, %c0_i32 : i32, i32
  }
  func.func @transform_1(%arg0: i32) -> (i32, i32) {
    %c0_i32 = arith.constant 0 : i32
    %c0_i32_0 = arith.constant 0 : i32
    %c0_i32_1 = arith.constant 0 : i32
    return %c0_i32, %c0_i32_0 : i32, i32
  }
  func.func @transform_2(%arg0: i32) -> (i32, i32) {
    %c0_i32 = arith.constant 0 : i32
    %c0_i32_0 = arith.constant 0 : i32
    %c0_i32_1 = arith.constant 0 : i32
    return %c0_i32, %c0_i32_0 : i32, i32
  }
  func.func @transform_3(%arg0: i32) -> (i32, i32) {
    %c0_i32 = arith.constant 0 : i32
    %c0_i32_0 = arith.constant 0 : i32
    return %arg0, %c0_i32 : i32, i32
  }
}

</mosaic_0001>

<llo_original>
// kernel: tpu_custom_call.1
$region0: #{tpu_custom_call.1}
  #allocation0 [shape = 'u32[]', space=smem, size = 0x4, offset = 0x4, fixed_abs, tag = 'smem constant byte address 0x4 - core index']
  #allocation1 [shape = 'u32[144,128]{1,0:T(1,128)}', space=vmem, size = 0x12000, scoped, tag = 'internal scratch']
  %s0 = inlined_call_operand.vmem [shape: f32[32,3], index: 0, kind: input, shape index: {}]
  %s1 = inlined_call_operand.vmem [shape: s32[1,39], index: 1, kind: input, shape index: {}]
  %s2 = inlined_call_operand.vmem [shape: f32[1,39], index: 2, kind: input, shape index: {}]
  %s3 = inlined_call_operand.hbm [shape: f32[32,39], index: 3, kind: output, shape index: {}]
  %s4 = sld [smem:[#allocation0]]
  $region22: #{tpu_custom_call.1} parent=0
    _
  %s6 = ssub.s32 1, %s4
  %s7 = scalar_select 0, %s6, %s4
  $region1: #{tpu_custom_call.1} parent=0
    #allocation2 [shape = 'u8[16384]{0}', space=vmem, size = 0x4000, scoped, tag = 'output window, operand 0, single buffered']
    #allocation3 [shape = 's32[1]{0}', space=sflag, size = 0x4, scoped, tag = 'scoped memory for tpu_custom_call.1']
    %8 = vsyncpa [#allocation3], 0
    // Predicated region
    $region2: #{tpu_custom_call.1} parent=1 // pred_check
      _
    $region3: #{tpu_custom_call.1} parent=1 // pred_check_branch
      %10 = sbr.rel (0) target = $region5
    $region4: #{tpu_custom_call.1} parent=1 // pred_region
      _
    $region5: #{tpu_custom_call.1} parent=1 // pred_fallthru
      _
    // Predicated region
    $region6: #{tpu_custom_call.1} parent=1 // pred_check
      _
    $region7: #{tpu_custom_call.1} parent=1 // pred_check_branch
      %12 = sbr.rel (0) target = $region9
    $region8: #{tpu_custom_call.1} parent=1 // pred_region
      _
    $region9: #{tpu_custom_call.1} parent=1 // pred_fallthru
      _
    // Predicated region
    $region10: #{tpu_custom_call.1} parent=1 // pred_check
      _
    $region11: #{tpu_custom_call.1} parent=1 // pred_check_branch
      %14 = sbr.rel (0) target = $region13
    $region12: #{tpu_custom_call.1} parent=1 // pred_region
      _
    $region13: #{tpu_custom_call.1} parent=1 // pred_fallthru
      _
    %v15 = vld [vmem:[%s0] sm:$0xff]
    %v16 = vld [vmem:[%s0 + $0x8] sm:$0xff]
    %v17 = vld [vmem:[%s0 + $0x10] sm:$0xff]
    %v18 = vld [vmem:[%s0 + $0x18] sm:$0xff]
    %v19 = vld [vmem:[%s1] sm:$0x1]
    %v20 = vld [vmem:[%s2] sm:$0x1]
    %vm21 = vcmp.eq.s32.totalorder %v19, 1
    %v22 = vsel %vm21, 1, 0
    %v23 = vlaneseq
    %v24 = vshrl.u32 %v23, 7
    %v25 = vsub.s32 0, %v24
    %v26 = vrot.slane %v22, %v25
    %vm27 = vcmp.eq.s32.totalorder %v26, 1
    %29 = vset.pattern.permute.xlu0 1
    %30 = vperm.xlu0 %29, %v15
    %v31 = vpop.permute.xlu0 %30
    %34 = vset.pattern.permute.xlu0 1
    %35 = vperm.xlu0 %34, %v16
    %v36 = vpop.permute.xlu0 %35
    %39 = vset.pattern.permute.xlu0 1
    %40 = vperm.xlu0 %39, %v17
    %v41 = vpop.permute.xlu0 %40
    %44 = vset.pattern.permute.xlu0 1
    %45 = vperm.xlu0 %44, %v18
    %v46 = vpop.permute.xlu0 %45
    %48 = vset.pattern.permute.xlu0 0
    %49 = vperm.xlu0 %48, %v15
    %v50 = vpop.permute.xlu0 %49
    %52 = vset.pattern.permute.xlu0 0
    %53 = vperm.xlu0 %52, %v16
    %v54 = vpop.permute.xlu0 %53
    %56 = vset.pattern.permute.xlu0 0
    %57 = vperm.xlu0 %56, %v17
    %v58 = vpop.permute.xlu0 %57
    %60 = vset.pattern.permute.xlu0 0
    %61 = vperm.xlu0 %60, %v18
    %v62 = vpop.permute.xlu0 %61
    %v64 = vsel %vm27, %v31, %v50
    %v65 = vsel %vm27, %v36, %v54
    %v66 = vsel %vm27, %v41, %v58
    %v67 = vsel %vm27, %v46, %v62
    %vm68 = vcmp.eq.s32.totalorder %v19, 2
    %v69 = vsel %vm68, 1, 0
    %v70 = vlaneseq
    %v71 = vshrl.u32 %v70, 7
    %v72 = vsub.s32 0, %v71
    %v73 = vrot.slane %v69, %v72
    %vm74 = vcmp.eq.s32.totalorder %v73, 1
    %75 = vset.pattern.permute.xlu0 2
    %76 = vperm.xlu0 %75, %v15
    %v77 = vpop.permute.xlu0 %76
    %79 = vset.pattern.permute.xlu0 2
    %80 = vperm.xlu0 %79, %v16
    %v81 = vpop.permute.xlu0 %80
    %83 = vset.pattern.permute.xlu0 2
    %84 = vperm.xlu0 %83, %v17
    %v85 = vpop.permute.xlu0 %84
    %87 = vset.pattern.permute.xlu0 2
    %88 = vperm.xlu0 %87, %v18
    %v89 = vpop.permute.xlu0 %88
    %v91 = vsel %vm74, %v77, %v64
    %v92 = vsel %vm74, %v81, %v65
    %v93 = vsel %vm74, %v85, %v66
    %v94 = vsel %vm74, %v89, %v67
    %v96 = vlaneseq
    %v97 = vshrl.u32 %v96, 7
    %v98 = vsub.s32 0, %v97
    %v99 = vrot.slane %v20, %v98
    %v101 = vmul.f32 %v91, %v99
    %v102 = vmul.f32 %v92, %v99
    %v103 = vmul.f32 %v93, %v99
    %v104 = vmul.f32 %v94, %v99
    %v105 = vlaneseq
    %v106 = vand.u32 %v105, 127
    %v107 = vand.u32 2147483647, %v101
    %vm108 = vcmp.le.f32.partialorder %v107, 0.7853982
    %vm109 = vcmp.lt.s32.totalorder %v101, 0
    %v110 = vand.u32 %v101, 2139095040
    %v111 = vshrl.u32 %v110, 23
    %v112 = vsub.s32 %v111, 127
    %v113 = vand.u32 2147483647, %v101
    %v114 = vand.u32 %v113, 8388607
    %v115 = vor.u32 %v114, 8388608
    %v116 = vsub.s32 0, %v115
    %v117 = vadd.s32 %v112, 1
    %vm118 = vcmp.gt.s32.totalorder %v117, 0
    %v119 = vsel %vm118, %v117, 0
    %v120 = vshrl.u32 %v119, 5
    %v121 = vand.u32 %v119, 31
    %v122 = vsub.s32 32, %v121
    %v123 = vshrl.u32 683565275, %v122
    %v124 = vshll.u32 683565275, %v121
    %v125 = vshrl.u32 2475754826, %v122
    %v126 = vor.u32 %v124, %v125
    %v127 = vshll.u32 2475754826, %v121
    %v128 = vshrl.u32 2131351028, %v122
    %v129 = vor.u32 %v127, %v128
    %v130 = vshll.u32 2131351028, %v121
    %v131 = vshrl.u32 2102212464, %v122
    %v132 = vor.u32 %v130, %v131
    %v133 = vshll.u32 2102212464, %v121
    %v134 = vshrl.u32 920167782, %v122
    %v135 = vor.u32 %v133, %v134
    %v136 = vshll.u32 920167782, %v121
    %v137 = vshrl.u32 1326507024, %v122
    %v138 = vor.u32 %v136, %v137
    %vm139 = vcmp.lt.s32.totalorder %v120, 1
    %vm140 = vcmp.lt.s32.totalorder %v120, 2
    %vm141 = vcmp.lt.s32.totalorder %v120, 3
    %vm142 = vcmp.lt.s32.totalorder %v120, 4
    %v143 = vsel %vm139, %v123, %v126
    %v144 = vsel %vm142, %v132, 2102212464
    %v145 = vsel %vm141, %v129, %v144
    %v146 = vsel %vm140, %v143, %v145
    %v147 = vsel %vm139, %v126, %v129
    %v148 = vsel %vm142, %v135, 920167782
    %v149 = vsel %vm141, %v132, %v148
    %v150 = vsel %vm140, %v147, %v149
    %v151 = vsel %vm139, %v129, %v132
    %v152 = vsel %vm142, %v138, 1326507024
    %v153 = vsel %vm141, %v135, %v152
    %v154 = vsel %vm140, %v151, %v153
    %v155 = vshll.u32 %v115, 8
    %v156 = vmul.u32.u64.compose %v155, %v154
    %v157 = vextract.low.u32 %v156
    %v158 = vextract.high.u32 %v156
    %v159 = vmul.u32.u64.compose %v155, %v150
    %v160 = vextract.low.u32 %v159
    %v161 = vextract.high.u32 %v159
    %v162 = vmul.u32 %v155, %v146
    %v163 = vadd.s32 %v158, %v160
    %vm164 = vc.u32 %v158, %v160
    %v165 = vadd.s32 %v161, 1
    %v166 = vsel %vm164, %v165, %v161
    %v167 = vadd.s32 %v162, %v166
    %v168 = vadd.s32 %v167, 536870912
    %v169 = vshrl.u32 %v168, 30
    %v170 = vshll.u32 %v169, 30
    %v171 = vsub.s32 %v167, %v170
    %vm172 = vcmp.lt.s32.totalorder %v171, 0
    %v173 = vsub.s32 0, %v171
    %v174 = vsel %vm172, %v173, %v171
    %v175 = vclz %v174
    %v176 = vsub.s32 %v175, 2
    %vm177 = vcmp.gt.s32.totalorder 0, %v176
    %v178 = vsel %vm177, 0, %v176
    %v179 = vsub.s32 32, %v178
    %v180 = vshll.u32 %v171, %v178
    %v181 = vshrl.u32 %v163, %v179
    %v182 = vor.u32 %v180, %v181
    %v183 = vsub.s32 4294967266, %v178
    %v184 = vadd.s32 %v183, 127
    %v185 = vshll.u32 %v184, 23
    %v186 = vor.u32 4788187, %v185
    %v187 = vand.u32 2147483647, %v186
    %v189 = vcvt.s32.f32 %v182
    %v190 = vmul.f32 %v189, %v187
    %v191 = vxor.u32 %v190, 2147483648
    %v192 = vsel %vm109, %v191, %v190
    %v193 = vsub.s32 4, %v169
    %v194 = vsel %vm109, %v193, %v169
    %v195 = vsel %vm108, %v101, %v192
    %v196 = vsel %vm108, 0, %v194
    %v197 = vcosq.f32.pop %v195
    %v198 = vsinq.f32.pop %v195
    %vm199 = vweird.f32 %v101
    %v200 = vand.u32 %v196, 3
    %vm201 = vcmp.lt.s32.totalorder %v200, 2
    %vm202 = vcmp.eq.s32.totalorder %v200, 0
    %v203 = vxor.u32 %v198, 2147483648
    %v204 = vsel %vm202, %v197, %v203
    %vm205 = vcmp.eq.s32.totalorder %v200, 2
    %v206 = vxor.u32 %v197, 2147483648
    %v207 = vsel %vm205, %v206, %v198
    %v208 = vsel %vm201, %v204, %v207
    %v209 = vsel %vm199, nan, %v208
    %v210 = vand.u32 2147483647, %v102
    %vm211 = vcmp.le.f32.partialorder %v210, 0.7853982
    %vm212 = vcmp.lt.s32.totalorder %v102, 0
    %v213 = vand.u32 %v102, 2139095040
    %v214 = vshrl.u32 %v213, 23
    %v215 = vsub.s32 %v214, 127
    %v216 = vand.u32 2147483647, %v102
    %v217 = vand.u32 %v216, 8388607
    %v218 = vor.u32 %v217, 8388608
    %v219 = vsub.s32 0, %v218
    %v220 = vadd.s32 %v215, 1
    %vm221 = vcmp.gt.s32.totalorder %v220, 0
    %v222 = vsel %vm221, %v220, 0
    %v223 = vshrl.u32 %v222, 5
    %v224 = vand.u32 %v222, 31
    %v225 = vsub.s32 32, %v224
    %v226 = vshrl.u32 683565275, %v225
    %v227 = vshll.u32 683565275, %v224
    %v228 = vshrl.u32 2475754826, %v225
    %v229 = vor.u32 %v227, %v228
    %v230 = vshll.u32 2475754826, %v224
    %v231 = vshrl.u32 2131351028, %v225
    %v232 = vor.u32 %v230, %v231
    %v233 = vshll.u32 2131351028, %v224
    %v234 = vshrl.u32 2102212464, %v225
    %v235 = vor.u32 %v233, %v234
    %v236 = vshll.u32 2102212464, %v224
    %v237 = vshrl.u32 920167782, %v225
    %v238 = vor.u32 %v236, %v237
    %v239 = vshll.u32 920167782, %v224
    %v240 = vshrl.u32 1326507024, %v225
    %v241 = vor.u32 %v239, %v240
    %vm242 = vcmp.lt.s32.totalorder %v223, 1
    %vm243 = vcmp.lt.s32.totalorder %v223, 2
    %vm244 = vcmp.lt.s32.totalorder %v223, 3
    %vm245 = vcmp.lt.s32.totalorder %v223, 4
    %v246 = vsel %vm242, %v226, %v229
    %v247 = vsel %vm245, %v235, 2102212464
    %v248 = vsel %vm244, %v232, %v247
    %v249 = vsel %vm243, %v246, %v248
    %v250 = vsel %vm242, %v229, %v232
    %v251 = vsel %vm245, %v238, 920167782
    %v252 = vsel %vm244, %v235, %v251
    %v253 = vsel %vm243, %v250, %v252
    %v254 = vsel %vm242, %v232, %v235
    %v255 = vsel %vm245, %v241, 1326507024
    %v256 = vsel %vm244, %v238, %v255
    %v257 = vsel %vm243, %v254, %v256
    %v258 = vshll.u32 %v218, 8
    %v259 = vmul.u32.u64.compose %v258, %v257
    %v260 = vextract.low.u32 %v259
    %v261 = vextract.high.u32 %v259
    %v262 = vmul.u32.u64.compose %v258, %v253
    %v263 = vextract.low.u32 %v262
    %v264 = vextract.high.u32 %v262
    %v265 = vmul.u32 %v258, %v249
    %v266 = vadd.s32 %v261, %v263
    %vm267 = vc.u32 %v261, %v263
    %v268 = vadd.s32 %v264, 1
    %v269 = vsel %vm267, %v268, %v264
    %v270 = vadd.s32 %v265, %v269
    %v271 = vadd.s32 %v270, 536870912
    %v272 = vshrl.u32 %v271, 30
    %v273 = vshll.u32 %v272, 30
    %v274 = vsub.s32 %v270, %v273
    %vm275 = vcmp.lt.s32.totalorder %v274, 0
    %v276 = vsub.s32 0, %v274
    %v277 = vsel %vm275, %v276, %v274
    %v278 = vclz %v277
    %v279 = vsub.s32 %v278, 2
    %vm280 = vcmp.gt.s32.totalorder 0, %v279
    %v281 = vsel %vm280, 0, %v279
    %v282 = vsub.s32 32, %v281
    %v283 = vshll.u32 %v274, %v281
    %v284 = vshrl.u32 %v266, %v282
    %v285 = vor.u32 %v283, %v284
    %v286 = vsub.s32 4294967266, %v281
    %v287 = vadd.s32 %v286, 127
    %v288 = vshll.u32 %v287, 23
    %v289 = vor.u32 4788187, %v288
    %v290 = vand.u32 2147483647, %v289
    %v292 = vcvt.s32.f32 %v285
    %v293 = vmul.f32 %v292, %v290
    %v294 = vxor.u32 %v293, 2147483648
    %v295 = vsel %vm212, %v294, %v293
    %v296 = vsub.s32 4, %v272
    %v297 = vsel %vm212, %v296, %v272
    %v298 = vsel %vm211, %v102, %v295
    %v299 = vsel %vm211, 0, %v297
    %v300 = vcosq.f32.pop %v298
    %v301 = vsinq.f32.pop %v298
    %vm302 = vweird.f32 %v102
    %v303 = vand.u32 %v299, 3
    %vm304 = vcmp.lt.s32.totalorder %v303, 2
    %vm305 = vcmp.eq.s32.totalorder %v303, 0
    %v306 = vxor.u32 %v301, 2147483648
    %v307 = vsel %vm305, %v300, %v306
    %vm308 = vcmp.eq.s32.totalorder %v303, 2
    %v309 = vxor.u32 %v300, 2147483648
    %v310 = vsel %vm308, %v309, %v301
    %v311 = vsel %vm304, %v307, %v310
    %v312 = vsel %vm302, nan, %v311
    %v313 = vand.u32 2147483647, %v103
    %vm314 = vcmp.le.f32.partialorder %v313, 0.7853982
    %vm315 = vcmp.lt.s32.totalorder %v103, 0
    %v316 = vand.u32 %v103, 2139095040
    %v317 = vshrl.u32 %v316, 23
    %v318 = vsub.s32 %v317, 127
    %v319 = vand.u32 2147483647, %v103
    %v320 = vand.u32 %v319, 8388607
    %v321 = vor.u32 %v320, 8388608
    %v322 = vsub.s32 0, %v321
    %v323 = vadd.s32 %v318, 1
    %vm324 = vcmp.gt.s32.totalorder %v323, 0
    %v325 = vsel %vm324, %v323, 0
    %v326 = vshrl.u32 %v325, 5
    %v327 = vand.u32 %v325, 31
    %v328 = vsub.s32 32, %v327
    %v329 = vshrl.u32 683565275, %v328
    %v330 = vshll.u32 683565275, %v327
    %v331 = vshrl.u32 2475754826, %v328
    %v332 = vor.u32 %v330, %v331
    %v333 = vshll.u32 2475754826, %v327
    %v334 = vshrl.u32 2131351028, %v328
    %v335 = vor.u32 %v333, %v334
    %v336 = vshll.u32 2131351028, %v327
    %v337 = vshrl.u32 2102212464, %v328
    %v338 = vor.u32 %v336, %v337
    %v339 = vshll.u32 2102212464, %v327
    %v340 = vshrl.u32 920167782, %v328
    %v341 = vor.u32 %v339, %v340
    %v342 = vshll.u32 920167782, %v327
    %v343 = vshrl.u32 1326507024, %v328
    %v344 = vor.u32 %v342, %v343
    %vm345 = vcmp.lt.s32.totalorder %v326, 1
    %vm346 = vcmp.lt.s32.totalorder %v326, 2
    %vm347 = vcmp.lt.s32.totalorder %v326, 3
    %vm348 = vcmp.lt.s32.totalorder %v326, 4
    %v349 = vsel %vm345, %v329, %v332
    %v350 = vsel %vm348, %v338, 2102212464
    %v351 = vsel %vm347, %v335, %v350
    %v352 = vsel %vm346, %v349, %v351
    %v353 = vsel %vm345, %v332, %v335
    %v354 = vsel %vm348, %v341, 920167782
    %v355 = vsel %vm347, %v338, %v354
    %v356 = vsel %vm346, %v353, %v355
    %v357 = vsel %vm345, %v335, %v338
    %v358 = vsel %vm348, %v344, 1326507024
    %v359 = vsel %vm347, %v341, %v358
    %v360 = vsel %vm346, %v357, %v359
    %v361 = vshll.u32 %v321, 8
    %v362 = vmul.u32.u64.compose %v361, %v360
    %v363 = vextract.low.u32 %v362
    %v364 = vextract.high.u32 %v362
    %v365 = vmul.u32.u64.compose %v361, %v356
    %v366 = vextract.low.u32 %v365
    %v367 = vextract.high.u32 %v365
    %v368 = vmul.u32 %v361, %v352
    %v369 = vadd.s32 %v364, %v366
    %vm370 = vc.u32 %v364, %v366
    %v371 = vadd.s32 %v367, 1
    %v372 = vsel %vm370, %v371, %v367
    %v373 = vadd.s32 %v368, %v372
    %v374 = vadd.s32 %v373, 536870912
    %v375 = vshrl.u32 %v374, 30
    %v376 = vshll.u32 %v375, 30
    %v377 = vsub.s32 %v373, %v376
    %vm378 = vcmp.lt.s32.totalorder %v377, 0
    %v379 = vsub.s32 0, %v377
    %v380 = vsel %vm378, %v379, %v377
    %v381 = vclz %v380
    %v382 = vsub.s32 %v381, 2
    %vm383 = vcmp.gt.s32.totalorder 0, %v382
    %v384 = vsel %vm383, 0, %v382
    %v385 = vsub.s32 32, %v384
    %v386 = vshll.u32 %v377, %v384
    %v387 = vshrl.u32 %v369, %v385
    %v388 = vor.u32 %v386, %v387
    %v389 = vsub.s32 4294967266, %v384
    %v390 = vadd.s32 %v389, 127
    %v391 = vshll.u32 %v390, 23
    %v392 = vor.u32 4788187, %v391
    %v393 = vand.u32 2147483647, %v392
    %v395 = vcvt.s32.f32 %v388
    %v396 = vmul.f32 %v395, %v393
    %v397 = vxor.u32 %v396, 2147483648
    %v398 = vsel %vm315, %v397, %v396
    %v399 = vsub.s32 4, %v375
    %v400 = vsel %vm315, %v399, %v375
    %v401 = vsel %vm314, %v103, %v398
    %v402 = vsel %vm314, 0, %v400
    %v403 = vcosq.f32.pop %v401
    %v404 = vsinq.f32.pop %v401
    %vm405 = vweird.f32 %v103
    %v406 = vand.u32 %v402, 3
    %vm407 = vcmp.lt.s32.totalorder %v406, 2
    %vm408 = vcmp.eq.s32.totalorder %v406, 0
    %v409 = vxor.u32 %v404, 2147483648
    %v410 = vsel %vm408, %v403, %v409
    %vm411 = vcmp.eq.s32.totalorder %v406, 2
    %v412 = vxor.u32 %v403, 2147483648
    %v413 = vsel %vm411, %v412, %v404
    %v414 = vsel %vm407, %v410, %v413
    %v415 = vsel %vm405, nan, %v414
    %v416 = vand.u32 2147483647, %v104
    %vm417 = vcmp.le.f32.partialorder %v416, 0.7853982
    %vm418 = vcmp.lt.s32.totalorder %v104, 0
    %v419 = vand.u32 %v104, 2139095040
    %v420 = vshrl.u32 %v419, 23
    %v421 = vsub.s32 %v420, 127
    %v422 = vand.u32 2147483647, %v104
    %v423 = vand.u32 %v422, 8388607
    %v424 = vor.u32 %v423, 8388608
    %v425 = vsub.s32 0, %v424
    %v426 = vadd.s32 %v421, 1
    %vm427 = vcmp.gt.s32.totalorder %v426, 0
    %v428 = vsel %vm427, %v426, 0
    %v429 = vshrl.u32 %v428, 5
    %v430 = vand.u32 %v428, 31
    %v431 = vsub.s32 32, %v430
    %v432 = vshrl.u32 683565275, %v431
    %v433 = vshll.u32 683565275, %v430
    %v434 = vshrl.u32 2475754826, %v431
    %v435 = vor.u32 %v433, %v434
    %v436 = vshll.u32 2475754826, %v430
    %v437 = vshrl.u32 2131351028, %v431
    %v438 = vor.u32 %v436, %v437
    %v439 = vshll.u32 2131351028, %v430
    %v440 = vshrl.u32 2102212464, %v431
    %v441 = vor.u32 %v439, %v440
    %v442 = vshll.u32 2102212464, %v430
    %v443 = vshrl.u32 920167782, %v431
    %v444 = vor.u32 %v442, %v443
    %v445 = vshll.u32 920167782, %v430
    %v446 = vshrl.u32 1326507024, %v431
    %v447 = vor.u32 %v445, %v446
    %vm448 = vcmp.lt.s32.totalorder %v429, 1
    %vm449 = vcmp.lt.s32.totalorder %v429, 2
    %vm450 = vcmp.lt.s32.totalorder %v429, 3
    %vm451 = vcmp.lt.s32.totalorder %v429, 4
    %v452 = vsel %vm448, %v432, %v435
    %v453 = vsel %vm451, %v441, 2102212464
    %v454 = vsel %vm450, %v438, %v453
    %v455 = vsel %vm449, %v452, %v454
    %v456 = vsel %vm448, %v435, %v438
    %v457 = vsel %vm451, %v444, 920167782
    %v458 = vsel %vm450, %v441, %v457
    %v459 = vsel %vm449, %v456, %v458
    %v460 = vsel %vm448, %v438, %v441
    %v461 = vsel %vm451, %v447, 1326507024
    %v462 = vsel %vm450, %v444, %v461
    %v463 = vsel %vm449, %v460, %v462
    %v464 = vshll.u32 %v424, 8
    %v465 = vmul.u32.u64.compose %v464, %v463
    %v466 = vextract.low.u32 %v465
    %v467 = vextract.high.u32 %v465
    %v468 = vmul.u32.u64.compose %v464, %v459
    %v469 = vextract.low.u32 %v468
    %v470 = vextract.high.u32 %v468
    %v471 = vmul.u32 %v464, %v455
    %v472 = vadd.s32 %v467, %v469
    %vm473 = vc.u32 %v467, %v469
    %v474 = vadd.s32 %v470, 1
    %v475 = vsel %vm473, %v474, %v470
    %v476 = vadd.s32 %v471, %v475
    %v477 = vadd.s32 %v476, 536870912
    %v478 = vshrl.u32 %v477, 30
    %v479 = vshll.u32 %v478, 30
    %v480 = vsub.s32 %v476, %v479
    %vm481 = vcmp.lt.s32.totalorder %v480, 0
    %v482 = vsub.s32 0, %v480
    %v483 = vsel %vm481, %v482, %v480
    %v484 = vclz %v483
    %v485 = vsub.s32 %v484, 2
    %vm486 = vcmp.gt.s32.totalorder 0, %v485
    %v487 = vsel %vm486, 0, %v485
    %v488 = vsub.s32 32, %v487
    %v489 = vshll.u32 %v480, %v487
    %v490 = vshrl.u32 %v472, %v488
    %v491 = vor.u32 %v489, %v490
    %v492 = vsub.s32 4294967266, %v487
    %v493 = vadd.s32 %v492, 127
    %v494 = vshll.u32 %v493, 23
    %v495 = vor.u32 4788187, %v494
    %v496 = vand.u32 2147483647, %v495
    %v498 = vcvt.s32.f32 %v491
    %v499 = vmul.f32 %v498, %v496
    %v500 = vxor.u32 %v499, 2147483648
    %v501 = vsel %vm418, %v500, %v499
    %v502 = vsub.s32 4, %v478
    %v503 = vsel %vm418, %v502, %v478
    %v504 = vsel %vm417, %v104, %v501
    %v505 = vsel %vm417, 0, %v503
    %v506 = vcosq.f32.pop %v504
    %v507 = vsinq.f32.pop %v504
    %vm508 = vweird.f32 %v104
    %v509 = vand.u32 %v505, 3
    %vm510 = vcmp.lt.s32.totalorder %v509, 2
    %vm511 = vcmp.eq.s32.totalorder %v509, 0
    %v512 = vxor.u32 %v507, 2147483648
    %v513 = vsel %vm511, %v506, %v512
    %vm514 = vcmp.eq.s32.totalorder %v509, 2
    %v515 = vxor.u32 %v506, 2147483648
    %v516 = vsel %vm514, %v515, %v507
    %v517 = vsel %vm510, %v513, %v516
    %v518 = vsel %vm508, nan, %v517
    %v519 = vand.u32 2147483647, %v101
    %vm520 = vcmp.le.f32.partialorder %v519, 0.7853982
    %vm521 = vcmp.lt.s32.totalorder %v101, 0
    %v522 = vand.u32 %v101, 2139095040
    %v523 = vshrl.u32 %v522, 23
    %v524 = vsub.s32 %v523, 127
    %v525 = vand.u32 2147483647, %v101
    %v526 = vand.u32 %v525, 8388607
    %v527 = vor.u32 %v526, 8388608
    %v528 = vsub.s32 0, %v527
    %v529 = vadd.s32 %v524, 1
    %vm530 = vcmp.gt.s32.totalorder %v529, 0
    %v531 = vsel %vm530, %v529, 0
    %v532 = vshrl.u32 %v531, 5
    %v533 = vand.u32 %v531, 31
    %v534 = vsub.s32 32, %v533
    %v535 = vshrl.u32 683565275, %v534
    %v536 = vshll.u32 683565275, %v533
    %v537 = vshrl.u32 2475754826, %v534
    %v538 = vor.u32 %v536, %v537
    %v539 = vshll.u32 2475754826, %v533
    %v540 = vshrl.u32 2131351028, %v534
    %v541 = vor.u32 %v539, %v540
    %v542 = vshll.u32 2131351028, %v533
    %v543 = vshrl.u32 2102212464, %v534
    %v544 = vor.u32 %v542, %v543
    %v545 = vshll.u32 2102212464, %v533
    %v546 = vshrl.u32 920167782, %v534
    %v547 = vor.u32 %v545, %v546
    %v548 = vshll.u32 920167782, %v533
    %v549 = vshrl.u32 1326507024, %v534
    %v550 = vor.u32 %v548, %v549
    %vm551 = vcmp.lt.s32.totalorder %v532, 1
    %vm552 = vcmp.lt.s32.totalorder %v532, 2
    %vm553 = vcmp.lt.s32.totalorder %v532, 3
    %vm554 = vcmp.lt.s32.totalorder %v532, 4
    %v555 = vsel %vm551, %v535, %v538
    %v556 = vsel %vm554, %v544, 2102212464
    %v557 = vsel %vm553, %v541, %v556
    %v558 = vsel %vm552, %v555, %v557
    %v559 = vsel %vm551, %v538, %v541
    %v560 = vsel %vm554, %v547, 920167782
    %v561 = vsel %vm553, %v544, %v560
    %v562 = vsel %vm552, %v559, %v561
    %v563 = vsel %vm551, %v541, %v544
    %v564 = vsel %vm554, %v550, 1326507024
    %v565 = vsel %vm553, %v547, %v564
    %v566 = vsel %vm552, %v563, %v565
    %v567 = vshll.u32 %v527, 8
    %v568 = vmul.u32.u64.compose %v567, %v566
    %v569 = vextract.low.u32 %v568
    %v570 = vextract.high.u32 %v568
    %v571 = vmul.u32.u64.compose %v567, %v562
    %v572 = vextract.low.u32 %v571
    %v573 = vextract.high.u32 %v571
    %v574 = vmul.u32 %v567, %v558
    %v575 = vadd.s32 %v570, %v572
    %vm576 = vc.u32 %v570, %v572
    %v577 = vadd.s32 %v573, 1
    %v578 = vsel %vm576, %v577, %v573
    %v579 = vadd.s32 %v574, %v578
    %v580 = vadd.s32 %v579, 536870912
    %v581 = vshrl.u32 %v580, 30
    %v582 = vshll.u32 %v581, 30
    %v583 = vsub.s32 %v579, %v582
    %vm584 = vcmp.lt.s32.totalorder %v583, 0
    %v585 = vsub.s32 0, %v583
    %v586 = vsel %vm584, %v585, %v583
    %v587 = vclz %v586
    %v588 = vsub.s32 %v587, 2
    %vm589 = vcmp.gt.s32.totalorder 0, %v588
    %v590 = vsel %vm589, 0, %v588
    %v591 = vsub.s32 32, %v590
    %v592 = vshll.u32 %v583, %v590
    %v593 = vshrl.u32 %v575, %v591
    %v594 = vor.u32 %v592, %v593
    %v595 = vsub.s32 4294967266, %v590
    %v596 = vadd.s32 %v595, 127
    %v597 = vshll.u32 %v596, 23
    %v598 = vor.u32 4788187, %v597
    %v599 = vand.u32 2147483647, %v598
    %v601 = vcvt.s32.f32 %v594
    %v602 = vmul.f32 %v601, %v599
    %v603 = vxor.u32 %v602, 2147483648
    %v604 = vsel %vm521, %v603, %v602
    %v605 = vsub.s32 4, %v581
    %v606 = vsel %vm521, %v605, %v581
    %v607 = vsel %vm520, %v101, %v604
    %v608 = vsel %vm520, 0, %v606
    %v609 = vcosq.f32.pop %v607
    %v610 = vsinq.f32.pop %v607
    %vm611 = vweird.f32 %v101
    %v612 = vadd.s32 %v608, 3
    %v613 = vand.u32 %v612, 3
    %vm614 = vcmp.lt.s32.totalorder %v613, 2
    %vm615 = vcmp.eq.s32.totalorder %v613, 0
    %v616 = vxor.u32 %v610, 2147483648
    %v617 = vsel %vm615, %v609, %v616
    %vm618 = vcmp.eq.s32.totalorder %v613, 2
    %v619 = vxor.u32 %v609, 2147483648
    %v620 = vsel %vm618, %v619, %v610
    %v621 = vsel %vm614, %v617, %v620
    %v622 = vsel %vm611, nan, %v621
    %v623 = vand.u32 2147483647, %v102
    %vm624 = vcmp.le.f32.partialorder %v623, 0.7853982
    %vm625 = vcmp.lt.s32.totalorder %v102, 0
    %v626 = vand.u32 %v102, 2139095040
    %v627 = vshrl.u32 %v626, 23
    %v628 = vsub.s32 %v627, 127
    %v629 = vand.u32 2147483647, %v102
    %v630 = vand.u32 %v629, 8388607
    %v631 = vor.u32 %v630, 8388608
    %v632 = vsub.s32 0, %v631
    %v633 = vadd.s32 %v628, 1
    %vm634 = vcmp.gt.s32.totalorder %v633, 0
    %v635 = vsel %vm634, %v633, 0
    %v636 = vshrl.u32 %v635, 5
    %v637 = vand.u32 %v635, 31
    %v638 = vsub.s32 32, %v637
    %v639 = vshrl.u32 683565275, %v638
    %v640 = vshll.u32 683565275, %v637
    %v641 = vshrl.u32 2475754826, %v638
    %v642 = vor.u32 %v640, %v641
    %v643 = vshll.u32 2475754826, %v637
    %v644 = vshrl.u32 2131351028, %v638
    %v645 = vor.u32 %v643, %v644
    %v646 = vshll.u32 2131351028, %v637
    %v647 = vshrl.u32 2102212464, %v638
    %v648 = vor.u32 %v646, %v647
    %v649 = vshll.u32 2102212464, %v637
    %v650 = vshrl.u32 920167782, %v638
    %v651 = vor.u32 %v649, %v650
    %v652 = vshll.u32 920167782, %v637
    %v653 = vshrl.u32 1326507024, %v638
    %v654 = vor.u32 %v652, %v653
    %vm655 = vcmp.lt.s32.totalorder %v636, 1
    %vm656 = vcmp.lt.s32.totalorder %v636, 2
    %vm657 = vcmp.lt.s32.totalorder %v636, 3
    %vm658 = vcmp.lt.s32.totalorder %v636, 4
    %v659 = vsel %vm655, %v639, %v642
    %v660 = vsel %vm658, %v648, 2102212464
    %v661 = vsel %vm657, %v645, %v660
    %v662 = vsel %vm656, %v659, %v661
    %v663 = vsel %vm655, %v642, %v645
    %v664 = vsel %vm658, %v651, 920167782
    %v665 = vsel %vm657, %v648, %v664
    %v666 = vsel %vm656, %v663, %v665
    %v667 = vsel %vm655, %v645, %v648
    %v668 = vsel %vm658, %v654, 1326507024
    %v669 = vsel %vm657, %v651, %v668
    %v670 = vsel %vm656, %v667, %v669
    %v671 = vshll.u32 %v631, 8
    %v672 = vmul.u32.u64.compose %v671, %v670
    %v673 = vextract.low.u32 %v672
    %v674 = vextract.high.u32 %v672
    %v675 = vmul.u32.u64.compose %v671, %v666
    %v676 = vextract.low.u32 %v675
    %v677 = vextract.high.u32 %v675
    %v678 = vmul.u32 %v671, %v662
    %v679 = vadd.s32 %v674, %v676
    %vm680 = vc.u32 %v674, %v676
    %v681 = vadd.s32 %v677, 1
    %v682 = vsel %vm680, %v681, %v677
    %v683 = vadd.s32 %v678, %v682
    %v684 = vadd.s32 %v683, 536870912
    %v685 = vshrl.u32 %v684, 30
    %v686 = vshll.u32 %v685, 30
    %v687 = vsub.s32 %v683, %v686
    %vm688 = vcmp.lt.s32.totalorder %v687, 0
    %v689 = vsub.s32 0, %v687
    %v690 = vsel %vm688, %v689, %v687
    %v691 = vclz %v690
    %v692 = vsub.s32 %v691, 2
    %vm693 = vcmp.gt.s32.totalorder 0, %v692
    %v694 = vsel %vm693, 0, %v692
    %v695 = vsub.s32 32, %v694
    %v696 = vshll.u32 %v687, %v694
    %v697 = vshrl.u32 %v679, %v695
    %v698 = vor.u32 %v696, %v697
    %v699 = vsub.s32 4294967266, %v694
    %v700 = vadd.s32 %v699, 127
    %v701 = vshll.u32 %v700, 23
    %v702 = vor.u32 4788187, %v701
    %v703 = vand.u32 2147483647, %v702
    %v705 = vcvt.s32.f32 %v698
    %v706 = vmul.f32 %v705, %v703
    %v707 = vxor.u32 %v706, 2147483648
    %v708 = vsel %vm625, %v707, %v706
    %v709 = vsub.s32 4, %v685
    %v710 = vsel %vm625, %v709, %v685
    %v711 = vsel %vm624, %v102, %v708
    %v712 = vsel %vm624, 0, %v710
    %v713 = vcosq.f32.pop %v711
    %v714 = vsinq.f32.pop %v711
    %vm715 = vweird.f32 %v102
    %v716 = vadd.s32 %v712, 3
    %v717 = vand.u32 %v716, 3
    %vm718 = vcmp.lt.s32.totalorder %v717, 2
    %vm719 = vcmp.eq.s32.totalorder %v717, 0
    %v720 = vxor.u32 %v714, 2147483648
    %v721 = vsel %vm719, %v713, %v720
    %vm722 = vcmp.eq.s32.totalorder %v717, 2
    %v723 = vxor.u32 %v713, 2147483648
    %v724 = vsel %vm722, %v723, %v714
    %v725 = vsel %vm718, %v721, %v724
    %v726 = vsel %vm715, nan, %v725
    %v727 = vand.u32 2147483647, %v103
    %vm728 = vcmp.le.f32.partialorder %v727, 0.7853982
    %vm729 = vcmp.lt.s32.totalorder %v103, 0
    %v730 = vand.u32 %v103, 2139095040
    %v731 = vshrl.u32 %v730, 23
    %v732 = vsub.s32 %v731, 127
    %v733 = vand.u32 2147483647, %v103
    %v734 = vand.u32 %v733, 8388607
    %v735 = vor.u32 %v734, 8388608
    %v736 = vsub.s32 0, %v735
    %v737 = vadd.s32 %v732, 1
    %vm738 = vcmp.gt.s32.totalorder %v737, 0
    %v739 = vsel %vm738, %v737, 0
    %v740 = vshrl.u32 %v739, 5
    %v741 = vand.u32 %v739, 31
    %v742 = vsub.s32 32, %v741
    %v743 = vshrl.u32 683565275, %v742
    %v744 = vshll.u32 683565275, %v741
    %v745 = vshrl.u32 2475754826, %v742
    %v746 = vor.u32 %v744, %v745
    %v747 = vshll.u32 2475754826, %v741
    %v748 = vshrl.u32 2131351028, %v742
    %v749 = vor.u32 %v747, %v748
    %v750 = vshll.u32 2131351028, %v741
    %v751 = vshrl.u32 2102212464, %v742
    %v752 = vor.u32 %v750, %v751
    %v753 = vshll.u32 2102212464, %v741
    %v754 = vshrl.u32 920167782, %v742
    %v755 = vor.u32 %v753, %v754
    %v756 = vshll.u32 920167782, %v741
    %v757 = vshrl.u32 1326507024, %v742
    %v758 = vor.u32 %v756, %v757
    %vm759 = vcmp.lt.s32.totalorder %v740, 1
    %vm760 = vcmp.lt.s32.totalorder %v740, 2
    %vm761 = vcmp.lt.s32.totalorder %v740, 3
    %vm762 = vcmp.lt.s32.totalorder %v740, 4
    %v763 = vsel %vm759, %v743, %v746
    %v764 = vsel %vm762, %v752, 2102212464
    %v765 = vsel %vm761, %v749, %v764
    %v766 = vsel %vm760, %v763, %v765
    %v767 = vsel %vm759, %v746, %v749
    %v768 = vsel %vm762, %v755, 920167782
    %v769 = vsel %vm761, %v752, %v768
    %v770 = vsel %vm760, %v767, %v769
    %v771 = vsel %vm759, %v749, %v752
    %v772 = vsel %vm762, %v758, 1326507024
    %v773 = vsel %vm761, %v755, %v772
    %v774 = vsel %vm760, %v771, %v773
    %v775 = vshll.u32 %v735, 8
    %v776 = vmul.u32.u64.compose %v775, %v774
    %v777 = vextract.low.u32 %v776
    %v778 = vextract.high.u32 %v776
    %v779 = vmul.u32.u64.compose %v775, %v770
    %v780 = vextract.low.u32 %v779
    %v781 = vextract.high.u32 %v779
    %v782 = vmul.u32 %v775, %v766
    %v783 = vadd.s32 %v778, %v780
    %vm784 = vc.u32 %v778, %v780
    %v785 = vadd.s32 %v781, 1
    %v786 = vsel %vm784, %v785, %v781
    %v787 = vadd.s32 %v782, %v786
    %v788 = vadd.s32 %v787, 536870912
    %v789 = vshrl.u32 %v788, 30
    %v790 = vshll.u32 %v789, 30
    %v791 = vsub.s32 %v787, %v790
    %vm792 = vcmp.lt.s32.totalorder %v791, 0
    %v793 = vsub.s32 0, %v791
    %v794 = vsel %vm792, %v793, %v791
    %v795 = vclz %v794
    %v796 = vsub.s32 %v795, 2
    %vm797 = vcmp.gt.s32.totalorder 0, %v796
    %v798 = vsel %vm797, 0, %v796
    %v799 = vsub.s32 32, %v798
    %v800 = vshll.u32 %v791, %v798
    %v801 = vshrl.u32 %v783, %v799
    %v802 = vor.u32 %v800, %v801
    %v803 = vsub.s32 4294967266, %v798
    %v804 = vadd.s32 %v803, 127
    %v805 = vshll.u32 %v804, 23
    %v806 = vor.u32 4788187, %v805
    %v807 = vand.u32 2147483647, %v806
    %v809 = vcvt.s32.f32 %v802
    %v810 = vmul.f32 %v809, %v807
    %v811 = vxor.u32 %v810, 2147483648
    %v812 = vsel %vm729, %v811, %v810
    %v813 = vsub.s32 4, %v789
    %v814 = vsel %vm729, %v813, %v789
    %v815 = vsel %vm728, %v103, %v812
    %v816 = vsel %vm728, 0, %v814
    %v817 = vcosq.f32.pop %v815
    %v818 = vsinq.f32.pop %v815
    %vm819 = vweird.f32 %v103
    %v820 = vadd.s32 %v816, 3
    %v821 = vand.u32 %v820, 3
    %vm822 = vcmp.lt.s32.totalorder %v821, 2
    %vm823 = vcmp.eq.s32.totalorder %v821, 0
    %v824 = vxor.u32 %v818, 2147483648
    %v825 = vsel %vm823, %v817, %v824
    %vm826 = vcmp.eq.s32.totalorder %v821, 2
    %v827 = vxor.u32 %v817, 2147483648
    %v828 = vsel %vm826, %v827, %v818
    %v829 = vsel %vm822, %v825, %v828
    %v830 = vsel %vm819, nan, %v829
    %v831 = vand.u32 2147483647, %v104
    %vm832 = vcmp.le.f32.partialorder %v831, 0.7853982
    %vm833 = vcmp.lt.s32.totalorder %v104, 0
    %v834 = vand.u32 %v104, 2139095040
    %v835 = vshrl.u32 %v834, 23
    %v836 = vsub.s32 %v835, 127
    %v837 = vand.u32 2147483647, %v104
    %v838 = vand.u32 %v837, 8388607
    %v839 = vor.u32 %v838, 8388608
    %v840 = vsub.s32 0, %v839
    %v841 = vadd.s32 %v836, 1
    %vm842 = vcmp.gt.s32.totalorder %v841, 0
    %v843 = vsel %vm842, %v841, 0
    %v844 = vshrl.u32 %v843, 5
    %v845 = vand.u32 %v843, 31
    %v846 = vsub.s32 32, %v845
    %v847 = vshrl.u32 683565275, %v846
    %v848 = vshll.u32 683565275, %v845
    %v849 = vshrl.u32 2475754826, %v846
    %v850 = vor.u32 %v848, %v849
    %v851 = vshll.u32 2475754826, %v845
    %v852 = vshrl.u32 2131351028, %v846
    %v853 = vor.u32 %v851, %v852
    %v854 = vshll.u32 2131351028, %v845
    %v855 = vshrl.u32 2102212464, %v846
    %v856 = vor.u32 %v854, %v855
    %v857 = vshll.u32 2102212464, %v845
    %v858 = vshrl.u32 920167782, %v846
    %v859 = vor.u32 %v857, %v858
    %v860 = vshll.u32 920167782, %v845
    %v861 = vshrl.u32 1326507024, %v846
    %v862 = vor.u32 %v860, %v861
    %vm863 = vcmp.lt.s32.totalorder %v844, 1
    %vm864 = vcmp.lt.s32.totalorder %v844, 2
    %vm865 = vcmp.lt.s32.totalorder %v844, 3
    %vm866 = vcmp.lt.s32.totalorder %v844, 4
    %v867 = vsel %vm863, %v847, %v850
    %v868 = vsel %vm866, %v856, 2102212464
    %v869 = vsel %vm865, %v853, %v868
    %v870 = vsel %vm864, %v867, %v869
    %v871 = vsel %vm863, %v850, %v853
    %v872 = vsel %vm866, %v859, 920167782
    %v873 = vsel %vm865, %v856, %v872
    %v874 = vsel %vm864, %v871, %v873
    %v875 = vsel %vm863, %v853, %v856
    %v876 = vsel %vm866, %v862, 1326507024
    %v877 = vsel %vm865, %v859, %v876
    %v878 = vsel %vm864, %v875, %v877
    %v879 = vshll.u32 %v839, 8
    %v880 = vmul.u32.u64.compose %v879, %v878
    %v881 = vextract.low.u32 %v880
    %v882 = vextract.high.u32 %v880
    %v883 = vmul.u32.u64.compose %v879, %v874
    %v884 = vextract.low.u32 %v883
    %v885 = vextract.high.u32 %v883
    %v886 = vmul.u32 %v879, %v870
    %v887 = vadd.s32 %v882, %v884
    %vm888 = vc.u32 %v882, %v884
    %v889 = vadd.s32 %v885, 1
    %v890 = vsel %vm888, %v889, %v885
    %v891 = vadd.s32 %v886, %v890
    %v892 = vadd.s32 %v891, 536870912
    %v893 = vshrl.u32 %v892, 30
    %v894 = vshll.u32 %v893, 30
    %v895 = vsub.s32 %v891, %v894
    %vm896 = vcmp.lt.s32.totalorder %v895, 0
    %v897 = vsub.s32 0, %v895
    %v898 = vsel %vm896, %v897, %v895
    %v899 = vclz %v898
    %v900 = vsub.s32 %v899, 2
    %vm901 = vcmp.gt.s32.totalorder 0, %v900
    %v902 = vsel %vm901, 0, %v900
    %v903 = vsub.s32 32, %v902
    %v904 = vshll.u32 %v895, %v902
    %v905 = vshrl.u32 %v887, %v903
    %v906 = vor.u32 %v904, %v905
    %v907 = vsub.s32 4294967266, %v902
    %v908 = vadd.s32 %v907, 127
    %v909 = vshll.u32 %v908, 23
    %v910 = vor.u32 4788187, %v909
    %v911 = vand.u32 2147483647, %v910
    %v913 = vcvt.s32.f32 %v906
    %v914 = vmul.f32 %v913, %v911
    %v915 = vxor.u32 %v914, 2147483648
    %v916 = vsel %vm833, %v915, %v914
    %v917 = vsub.s32 4, %v893
    %v918 = vsel %vm833, %v917, %v893
    %v919 = vsel %vm832, %v104, %v916
    %v920 = vsel %vm832, 0, %v918
    %v921 = vcosq.f32.pop %v919
    %v922 = vsinq.f32.pop %v919
    %vm923 = vweird.f32 %v104
    %v924 = vadd.s32 %v920, 3
    %v925 = vand.u32 %v924, 3
    %vm926 = vcmp.lt.s32.totalorder %v925, 2
    %vm927 = vcmp.eq.s32.totalorder %v925, 0
    %v928 = vxor.u32 %v922, 2147483648
    %v929 = vsel %vm927, %v921, %v928
    %vm930 = vcmp.eq.s32.totalorder %v925, 2
    %v931 = vxor.u32 %v921, 2147483648
    %v932 = vsel %vm930, %v931, %v922
    %v933 = vsel %vm926, %v929, %v932
    %v934 = vsel %vm923, nan, %v933
    %vm935 = vcmp.lt.s32.totalorder %v106, 18
    %vm936 = vcmp.lt.s32.totalorder %v106, 36
    %v937 = vsel %vm936, 1, 0
    %vm938 = vcmp.eq.s32.totalorder %v937, 1
    %v939 = vsel %vm938, %v622, %v101
    %v940 = vsel %vm938, %v726, %v102
    %v941 = vsel %vm938, %v830, %v103
    %v942 = vsel %vm938, %v934, %v104
    %v943 = vsel %vm935, 1, 0
    %vm944 = vcmp.eq.s32.totalorder %v943, 1
    %v945 = vsel %vm944, %v209, %v939
    %v946 = vsel %vm944, %v312, %v940
    %v947 = vsel %vm944, %v415, %v941
    %v948 = vsel %vm944, %v518, %v942
    %vm949 = vcmask 318464
    %950 = vst.msk [vmem:[#allocation2] sm:$0xff] %vm949, %v945
    %951 = vst.msk [vmem:[#allocation2 + $0x8] sm:$0xff] %vm949, %v946
    %952 = vst.msk [vmem:[#allocation2 + $0x10] sm:$0xff] %vm949, %v947
    %953 = vst.msk [vmem:[#allocation2 + $0x18] sm:$0xff] %vm949, %v948
    // Predicated region
    $region14: #{tpu_custom_call.1} parent=1 // pred_check
      _
    $region15: #{tpu_custom_call.1} parent=1 // pred_check_branch
      %955 = sbr.rel (0) target = $region17
    $region16: #{tpu_custom_call.1} parent=1 // pred_region
      %s957 = ssub.s32 512, 512
      %958 = vsyncadd [#allocation3], %s957
      %s959 = sshll.u32 [#allocation2], 4
      %s960 = int_to_ptr.vmem [resolvable:$true] %s959
      %965 = dma.vmem_to_hbm [thread:$0]  %s960, 512, %s3, [#allocation3], 128, 128, 8
    $region17: #{tpu_custom_call.1} parent=1 // pred_fallthru
      _
    // Predicated region
    $region18: #{tpu_custom_call.1} parent=1 // pred_check
      _
    $region19: #{tpu_custom_call.1} parent=1 // pred_check_branch
      %967 = sbr.rel (0) target = $region21
    $region20: #{tpu_custom_call.1} parent=1 // pred_region
      %968 = dma.done [#allocation3], 512
    $region21: #{tpu_custom_call.1} parent=1 // pred_fallthru
      _
    %969 = vsyncpa [#allocation3], 1

</llo_original>
